<compile_context>
chip_gen: v7x
topology: tpu7x:2x2x1
jax: 0.10.0
libtpu: 0.0.40
codegen_flags: <defaults>
</compile_context>

<pallas_src>
import jax
import jax.numpy as jnp
from jax.experimental import pallas as pl
from jax.experimental.pallas import tpu as pltpu

_LANE = 128
_TARGET_BLOCK_BYTES = 2 * 1024 * 1024  # ~2 MiB/block: near HBM roofline, safe VMEM.


def _sublane_multiple(dtype) -> int:
    itemsize = jnp.dtype(dtype).itemsize
    return {4: 8, 2: 16, 1: 32}.get(itemsize, 8)


def _make_swish_kernel(compute_dtype):
    def _swish_kernel(x_ref, o_ref):
        x = x_ref[...].astype(compute_dtype)
        # sigmoid(x) == 0.5 * (tanh(0.5*x) + 1): one EUP op instead of exp+div.
        sig = 0.5 * (jnp.tanh(0.5 * x) + 1.0)
        o_ref[...] = (x * sig).astype(o_ref.dtype)

    return _swish_kernel


def swish(x: jax.Array) -> jax.Array:
    """Elementwise Swish: x * sigmoid(x). Any shape / floating dtype."""
    orig_shape = x.shape
    orig_dtype = x.dtype
    n = x.size
    if n == 0:
        return x

    if orig_dtype == jnp.float32 or orig_dtype == jnp.bfloat16:
        compute_dtype = orig_dtype
    else:
        compute_dtype = jnp.float32

    x_flat = jnp.reshape(x, (-1,))
    pad = (-n) % _LANE
    if pad:
        # Rare path: total size not a multiple of 128 lanes.
        # TODO(synk): handle the <128-element tail with a tiny plain-JAX epilogue
        # instead of this pad+slice copy.
        x_flat = jnp.concatenate([x_flat, jnp.zeros((pad,), dtype=orig_dtype)])
    n_padded = n + pad

    # Wide lane-dense rows: largest multiple of 128 (<=4096) dividing the size.
    lane_width = _LANE
    for cand in (4096, 2048, 1024, 512, 256):
        if n_padded % cand == 0:
            lane_width = cand
            break
    rows = n_padded // lane_width
    x2d = jnp.reshape(x_flat, (rows, lane_width))

    itemsize = jnp.dtype(orig_dtype).itemsize
    sub = _sublane_multiple(orig_dtype)

    # ~2 MiB blocks, but keep >= ~8 grid steps when the tensor is big enough so
    # the "parallel" axis can be sharded across v7x's two TensorCores.
    row_bytes = lane_width * itemsize
    block_rows = max(1, _TARGET_BLOCK_BYTES // row_bytes)
    block_rows = min(block_rows, pl.cdiv(rows, 8))
    if rows <= sub or block_rows < sub:
        block_rows = rows  # full-dim block (always a legal block shape)
    else:
        block_rows = (block_rows // sub) * sub
        block_rows = min(block_rows, rows)

    grid = (pl.cdiv(rows, block_rows),)  # partial tail block masked by Pallas

    out2d = pl.pallas_call(
        _make_swish_kernel(compute_dtype),
        out_shape=jax.ShapeDtypeStruct((rows, lane_width), orig_dtype),
        grid=grid,
        in_specs=[pl.BlockSpec((block_rows, lane_width), lambda i: (i, 0))],
        out_specs=pl.BlockSpec((block_rows, lane_width), lambda i: (i, 0)),
        compiler_params=pltpu.CompilerParams(
            dimension_semantics=("parallel",),
            vmem_limit_bytes=32 * 1024 * 1024,
        ),
    )(x2d)

    if pad:
        out_flat = jnp.reshape(out2d, (-1,))[:n]
        return jnp.reshape(out_flat, orig_shape)
    return jnp.reshape(out2d, orig_shape)


if __name__ == "__main__":
    key = jax.random.PRNGKey(0)

    # Primary check: NCHW activation, batch=2, channels=4, spatial=16 (f32).
    x = jax.random.normal(key, (2, 4, 16, 16), dtype=jnp.float32)
    y = jax.block_until_ready(swish(x))
    y_ref = x * jax.nn.sigmoid(x)
    assert y.shape == x.shape and y.dtype == x.dtype
    assert jnp.max(jnp.abs(y - y_ref)) < 1e-5

    # Odd size (not a multiple of 128): exercises the rare pad path.
    x_odd = jax.random.normal(jax.random.PRNGKey(1), (3, 5, 7, 6), dtype=jnp.float32)
    y_odd = jax.block_until_ready(swish(x_odd))
    y_odd_ref = x_odd * jax.nn.sigmoid(x_odd)
    assert y_odd.shape == x_odd.shape
    assert jnp.max(jnp.abs(y_odd - y_odd_ref)) < 1e-5

    # bf16 path: compute directly in bf16 (looser tolerance vs f32 reference).
    x_bf = jax.random.normal(jax.random.PRNGKey(2), (2, 4, 16, 16), dtype=jnp.bfloat16)
    y_bf = jax.block_until_ready(swish(x_bf))
    xf = x_bf.astype(jnp.float32)
    y_bf_ref = xf * jax.nn.sigmoid(xf)
    assert y_bf.dtype == jnp.bfloat16
    assert jnp.max(jnp.abs(y_bf.astype(jnp.float32) - y_bf_ref)) < 5e-2

    print("KERNEL_OK")
</pallas_src>

<mosaic_0001>
module attributes {stable_mosaic.version = 11 : i64} {
  func.func @_swish_kernel(%arg0: i32, %arg1: memref<1x2048xf32, #tpu.memory_space<vmem>>, %arg2: memref<1x2048xf32, #tpu.memory_space<vmem>>) attributes {dimension_semantics = [#tpu.dimension_semantics<parallel>], iteration_bounds = array<i64: 1>, scalar_prefetch = 0 : i64, scratch_operands = 0 : i64, tpu.core_type = #tpu.core_type<tc>, window_params = [{transform_indices = @transform_0, window_bounds = array<i64: 1, 2048>}, {transform_indices = @transform_1, window_bounds = array<i64: 1, 2048>}]} {
    %c0 = arith.constant 0 : index
    %c0_0 = arith.constant 0 : index
    %0 = vector.load %arg1[%c0, %c0_0] : memref<1x2048xf32, #tpu.memory_space<vmem>>, vector<1x2048xf32>
    %cst = arith.constant 5.000000e-01 : f32
    %1 = vector.broadcast %cst : f32 to vector<1x2048xf32>
    %2 = arith.mulf %1, %0 : vector<1x2048xf32>
    %3 = math.tanh %2 : vector<1x2048xf32>
    %cst_1 = arith.constant 1.000000e+00 : f32
    %4 = vector.broadcast %cst_1 : f32 to vector<1x2048xf32>
    %5 = arith.addf %3, %4 : vector<1x2048xf32>
    %cst_2 = arith.constant 5.000000e-01 : f32
    %6 = vector.broadcast %cst_2 : f32 to vector<1x2048xf32>
    %7 = arith.mulf %6, %5 : vector<1x2048xf32>
    %8 = arith.mulf %0, %7 : vector<1x2048xf32>
    %c0_3 = arith.constant 0 : index
    %c0_4 = arith.constant 0 : index
    %9 = vector.load %arg2[%c0_3, %c0_4] : memref<1x2048xf32, #tpu.memory_space<vmem>>, vector<1x2048xf32>
    tpu.vector_store %arg2[%c0_3, %c0_4], %8 {strides = array<i32>} : memref<1x2048xf32, #tpu.memory_space<vmem>>, vector<1x2048xf32>,
    return
  }
  func.func @transform_0(%arg0: i32) -> (i32, i32) {
    %c0_i32 = arith.constant 0 : i32
    %c0_i32_0 = arith.constant 0 : i32
    return %arg0, %c0_i32 : i32, i32
  }
  func.func @transform_1(%arg0: i32) -> (i32, i32) {
    %c0_i32 = arith.constant 0 : i32
    %c0_i32_0 = arith.constant 0 : i32
    return %arg0, %c0_i32 : i32, i32
  }
}

</mosaic_0001>

<llo_original>
// kernel: tpu_custom_call.1
$region0: #{tpu_custom_call.1}
  #allocation0 [shape = 'u32[]', space=smem, size = 0x4, offset = 0x4, fixed_abs, tag = 'smem constant byte address 0x4 - core index']
  #allocation1 [shape = 'u32[144,128]{1,0:T(1,128)}', space=vmem, size = 0x12000, scoped, tag = 'internal scratch']
  %s0 = inlined_call_operand.hbm [shape: f32[1,2048], index: 0, kind: input, shape index: {}]
  %s1 = inlined_call_operand.hbm [shape: f32[1,2048], index: 1, kind: output, shape index: {}]
  %s2 = sld [smem:[#allocation0]]
  $region18: #{tpu_custom_call.1} parent=0
    _
  %s4 = ssub.s32 1, %s2
  %s5 = scalar_select 0, %s4, %s2
  $region1: #{tpu_custom_call.1} parent=0
    #allocation2 [shape = 'u8[8192]{0}', space=vmem, size = 0x2000, scoped, tag = 'input window, operand 0, single buffered']
    #allocation3 [shape = 's32[1]{0}', space=sflag, size = 0x4, scoped, tag = 'scoped memory for tpu_custom_call.1']
    #allocation4 [shape = 's32[1]{0}', space=sflag, size = 0x4, scoped, tag = 'scoped memory for tpu_custom_call.1']
    #allocation5 [shape = 'u8[8192]{0}', space=vmem, size = 0x2000, scoped, tag = 'output window, operand 0, single buffered']
    %6 = vsyncpa [#allocation3], 0
    %7 = vsyncpa [#allocation4], 0
    // Predicated region
    $region2: #{tpu_custom_call.1} parent=1 // pred_check
      _
    $region3: #{tpu_custom_call.1} parent=1 // pred_check_branch
      %9 = sbr.rel (0) target = $region5
    $region4: #{tpu_custom_call.1} parent=1 // pred_region
      %s11 = ssub.s32 256, 256
      %12 = vsyncadd [#allocation3], %s11
      %s14 = sshll.u32 [#allocation2], 4
      %s15 = int_to_ptr.vmem [resolvable:$true] %s14
      %17 = dma.hbm_to_vmem [thread:$0]  %s0, 256, %s15, [#allocation3]
    $region5: #{tpu_custom_call.1} parent=1 // pred_fallthru
      _
    // Predicated region
    $region6: #{tpu_custom_call.1} parent=1 // pred_check
      _
    $region7: #{tpu_custom_call.1} parent=1 // pred_check_branch
      %19 = sbr.rel (0) target = $region9
    $region8: #{tpu_custom_call.1} parent=1 // pred_region
      %20 = dma.done [#allocation3], 256
    $region9: #{tpu_custom_call.1} parent=1 // pred_fallthru
      _
    %v21 = vld [vmem:[#allocation2] sm:$0xff]
    %v22 = vld [vmem:[#allocation2 + $0x8] sm:$0xff]
    %v23 = vmul.f32 %v21, 0.5
    %v24 = vmul.f32 %v22, 0.5
    %v25 = vtanh.pop %v23
    %v26 = vtanh.pop %v24
    %v27 = vadd.f32 %v25, 1.0
    %v28 = vadd.f32 %v26, 1.0
    %v29 = vmul.f32 %v27, 0.5
    %v30 = vmul.f32 %v28, 0.5
    %v31 = vmul.f32 %v21, %v29
    %v32 = vmul.f32 %v22, %v30
    %33 = vst [vmem:[#allocation5] sm:$0xff] %v31
    %34 = vst [vmem:[#allocation5 + $0x8] sm:$0xff] %v32
    // Predicated region
    $region10: #{tpu_custom_call.1} parent=1 // pred_check
      _
    $region11: #{tpu_custom_call.1} parent=1 // pred_check_branch
      %36 = sbr.rel (0) target = $region13
    $region12: #{tpu_custom_call.1} parent=1 // pred_region
      %s38 = ssub.s32 256, 256
      %39 = vsyncadd [#allocation4], %s38
      %s41 = sshll.u32 [#allocation5], 4
      %s42 = int_to_ptr.vmem [resolvable:$true] %s41
      %44 = dma.vmem_to_hbm [thread:$0]  %s42, 256, %s1, [#allocation4]
    $region13: #{tpu_custom_call.1} parent=1 // pred_fallthru
      _
    // Predicated region
    $region14: #{tpu_custom_call.1} parent=1 // pred_check
      _
    $region15: #{tpu_custom_call.1} parent=1 // pred_check_branch
      %46 = sbr.rel (0) target = $region17
    $region16: #{tpu_custom_call.1} parent=1 // pred_region
      %47 = dma.done [#allocation4], 256
    $region17: #{tpu_custom_call.1} parent=1 // pred_fallthru
      _
    %48 = vsyncpa [#allocation3], 1
    %49 = vsyncpa [#allocation4], 1

</llo_original>
